<compile_context>
chip_gen: v5e
topology: v5e:2x2
jax: 0.10.0
libtpu: 0.0.40
codegen_flags: <defaults>
</compile_context>

<pallas_src>
import jax
import jax.numpy as jnp
from jax.experimental import pallas as pl
from jax.experimental.pallas import tpu as pltpu

# ---- sizes (small, consistent with the module's forward) -------------------
B = 2                      # batch
LASER = 360                # laser scan length (hard-coded 360 in the module)
KCONV = 4                  # Conv1d kernel size
H = 48                     # hidden_size (forward requires H % 3 == 0)
L = LASER - KCONV + 1      # 357 conv output length
LIN_IN = H * (LASER - 3)   # H * 357, nn.Linear in_features
LIN_OUT = (H * 2) // 3     # 32
LIN2_OUT = H // 3          # 16
N_LAYERS = 2
GP = 128                   # lane pitch per GRU gate (tile-aligned gate blocks)
KIN = LASER + 4            # 364 packed input-stage K (laser | speed | bias row)


def _vmem():
    return pl.BlockSpec(memory_space=pltpu.MemorySpace.VMEM)


# ---------------------------------------------------------------------------
# Shared in-kernel math
# ---------------------------------------------------------------------------
def _input_stage(laser, noise, speed, win_ref):
    """clip(laser - noise, 0, 1) -> folded conv/flatten/linear + linear2 + concat."""
    x = jnp.clip(laser - noise, 0.0, 1.0)                                  # (B, 360)
    return (jnp.dot(x, win_ref[0:LASER, :],
                    preferred_element_type=jnp.float32)                    # laser path
            + jnp.dot(speed, win_ref[LASER:LASER + 3, :],
                      preferred_element_type=jnp.float32)                  # speed path
            + win_ref[LASER + 3:LASER + 4, :])                             # bias row


def _gru_stack(gru_in, h, gru_ref):
    """PyTorch 1-layer GRU applied N_LAYERS times with shared weights (seq_len=1)."""
    wi = gru_ref[0:H, :]                       # (H, 384) gate blocks at lanes 0/128/256
    wh = gru_ref[H:2 * H, :]                   # (H, 384)
    bi = gru_ref[2 * H:2 * H + 1, :]           # (1, 384) merged r/z bias + b_in
    bh = gru_ref[2 * H + 1:2 * H + 2, :]       # (1, 384) b_hn on the n lanes only
    xx = gru_in
    for _ in range(N_LAYERS):
        gi = jnp.dot(xx, wi, preferred_element_type=jnp.float32) + bi
        gh = jnp.dot(h, wh, preferred_element_type=jnp.float32) + bh
        r = jax.nn.sigmoid(gi[:, 0:H] + gh[:, 0:H])                        # lanes   0:48
        z = jax.nn.sigmoid(gi[:, GP:GP + H] + gh[:, GP:GP + H])            # lanes 128:176
        n = jnp.tanh(gi[:, 2 * GP:2 * GP + H] + r * gh[:, 2 * GP:2 * GP + H])  # b_hn inside r*(.)
        h = (1.0 - z) * n + z * h
        xx = h
    return h


# ---------------------------------------------------------------------------
# Single-step kernel (matches EncoderRNN.forward exactly) — 6 operands, 1 output
# ---------------------------------------------------------------------------
def _encoder_kernel(laser_ref, noise_ref, speed_ref, h0_ref, win_ref, gru_ref, out_ref):
    gru_in = _input_stage(laser_ref[...], noise_ref[...], speed_ref[...], win_ref)
    out_ref[...] = _gru_stack(gru_in, h0_ref[...], gru_ref)


def encoder_forward(params, laser, speed, hidden, noise):
    """One forward() call.  Returns (output (B,1,H), hidden (1,B,H)) — same data."""
    bsz = laser.shape[0]
    h = pl.pallas_call(
        _encoder_kernel,
        out_shape=jax.ShapeDtypeStruct((bsz, H), jnp.float32),
        in_specs=[_vmem() for _ in range(6)],
        out_specs=_vmem(),
    )(laser, noise[None, :], speed, hidden[0], params["w_in"], params["gru"])
    return h[:, None, :], h[None, :, :]


# ---------------------------------------------------------------------------
# Rollout kernel: grid over timesteps, weights resident in VMEM, hidden carried
# in a VMEM scratch (P3 accumulator pattern).  Per-step activations stream with
# the default double-buffered BlockSpec pipeline.
# ---------------------------------------------------------------------------
def _encoder_rollout_kernel(laser_ref, noise_ref, speed_ref, h0_ref, win_ref, gru_ref,
                            out_ref, h_scr):
    @pl.when(pl.program_id(0) == 0)
    def _():
        h_scr[...] = h0_ref[...]

    gru_in = _input_stage(laser_ref[0], noise_ref[0], speed_ref[0], win_ref)
    h = _gru_stack(gru_in, h_scr[...], gru_ref)
    h_scr[...] = h
    out_ref[0, :, :] = h


def encoder_rollout(params, laser_seq, speed_seq, hidden, noise_seq):
    """T chained forward() calls in one pallas_call.

    laser_seq (T,B,360), speed_seq (T,B,3), hidden (1,B,H), noise_seq (T,360)
    -> outputs (T,B,H) and final hidden (1,B,H).
    """
    T, bsz, _ = laser_seq.shape
    outs = pl.pallas_call(
        _encoder_rollout_kernel,
        out_shape=jax.ShapeDtypeStruct((T, bsz, H), jnp.float32),
        grid=(T,),
        in_specs=[
            pl.BlockSpec((1, bsz, LASER), lambda t: (t, 0, 0)),   # laser: streamed per step
            pl.BlockSpec((1, 1, LASER), lambda t: (t, 0, 0)),     # noise: streamed per step
            pl.BlockSpec((1, bsz, 3), lambda t: (t, 0, 0)),       # speed: streamed per step
            pl.BlockSpec((bsz, H), lambda t: (0, 0)),             # h0:   resident
            pl.BlockSpec((KIN, H), lambda t: (0, 0)),             # w_in: resident
            pl.BlockSpec((2 * H + 2, 3 * GP), lambda t: (0, 0)),  # gru:  resident
        ],
        out_specs=pl.BlockSpec((1, bsz, H), lambda t: (t, 0, 0)),
        scratch_shapes=[pltpu.VMEM((bsz, H), jnp.float32)],       # carried hidden state
        # Time axis carries state -> "arbitrary".  Add a leading "parallel" axis over
        # independent environments/rollouts to use v7x's second TensorCore.
        compiler_params=pltpu.CompilerParams(dimension_semantics=("arbitrary",)),
    )(laser_seq, noise_seq[:, None, :], speed_seq, hidden[0],
      params["w_in"], params["gru"])
    return outs, outs[-1][None]


# ---------------------------------------------------------------------------
# Deterministic parameter init (raw shapes per the module's __init__), plus the
# one-time algebraic fold of conv -> flatten -> linear -> concat into the packed
# (364, H) input matrix, and gate-merged / lane-aligned / bias-merged GRU pack.
# Fold is exact up to fp32 re-association of the K=17136 reduction.
# ---------------------------------------------------------------------------
def init_params(key):
    ks = jax.random.split(key, 10)

    def u(k, shape, bound):
        return jax.random.uniform(k, shape, jnp.float32, -bound, bound)

    conv_w = u(ks[0], (H, 1, KCONV), 0.5)                   # Conv1d(1, H, 4).weight
    conv_b = u(ks[1], (H,), 0.5)
    lin_w = u(ks[2], (LIN_OUT, LIN_IN), 1.0 / (LIN_IN ** 0.5))
    lin_b = u(ks[3], (LIN_OUT,), 1.0 / (LIN_IN ** 0.5))
    lin2_w = u(ks[4], (LIN2_OUT, 3), 1.0 / (3 ** 0.5))
    lin2_b = u(ks[5], (LIN2_OUT,), 1.0 / (3 ** 0.5))
    w_ih = u(ks[6], (3 * H, H), 1.0 / (H ** 0.5))           # GRU weight_ih_l0 [r,z,n]
    w_hh = u(ks[7], (3 * H, H), 1.0 / (H ** 0.5))           # GRU weight_hh_l0
    b_ih = u(ks[8], (3 * H,), 1.0 / (H ** 0.5))
    b_hh = u(ks[9], (3 * H,), 1.0 / (H ** 0.5))

    # ---- fold conv(1->H, k=4) -> view(B,1,-1) -> linear(H*357 -> 32) ----
    #   laser_out[b,o] = lin_b[o] + sum_{h,l} lin_w[o, h*L+l] *
    #                    (conv_b[h] + sum_k conv_w[h,0,k] * noisy[b, l+k])
    lin_w_r = lin_w.reshape(LIN_OUT, H, L)                  # flat index == h*L + l
    w_eff = jnp.zeros((LASER, LIN_OUT), jnp.float32)
    for k in range(KCONV):                                  # 4 taps, init-time only
        tap = jnp.einsum("h,ohl->lo", conv_w[:, 0, k], lin_w_r,
                         precision=jax.lax.Precision.HIGHEST)      # (L, LIN_OUT)
        w_eff = w_eff.at[k:k + L, :].add(tap)               # position t = l + k
    b_eff = lin_b + jnp.einsum("h,ohl->o", conv_b, lin_w_r,
                               precision=jax.lax.Precision.HIGHEST)

    # ---- input-stage pack (364, H): torch.cat((speed_out, laser_out), 2) is folded
    #      into lane placement: speed -> lanes [0:16], laser -> lanes [16:48].
    w_in = jnp.zeros((KIN, H), jnp.float32)
    w_in = w_in.at[:LASER, LIN2_OUT:].set(w_eff)            # laser path
    w_in = w_in.at[LASER:LASER + 3, :LIN2_OUT].set(lin2_w.T)  # speed path
    w_in = w_in.at[LASER + 3, :].set(jnp.concatenate([lin2_b, b_eff]))  # bias row

    # ---- GRU pack (2H+2, 384): lane-aligned gate blocks at lanes 0 / 128 / 256 ----
    def _pad_gates(w):                                      # w: (3H, H), rows [r|z|n]
        wt = w.T                                            # (H, 3H) cols [r|z|n]
        out = jnp.zeros((H, 3 * GP), jnp.float32)
        for g in range(3):
            out = out.at[:, g * GP:g * GP + H].set(wt[:, g * H:(g + 1) * H])
        return out

    wi_p = _pad_gates(w_ih)                                 # (H, 384)
    wh_p = _pad_gates(w_hh)                                 # (H, 384)
    # merged bias on the gi side: r -> b_ir+b_hr, z -> b_iz+b_hz, n -> b_in
    b_i = jnp.zeros((3 * GP,), jnp.float32)
    b_i = b_i.at[0:H].set(b_ih[0:H] + b_hh[0:H])
    b_i = b_i.at[GP:GP + H].set(b_ih[H:2 * H] + b_hh[H:2 * H])
    b_i = b_i.at[2 * GP:2 * GP + H].set(b_ih[2 * H:3 * H])
    # gh side only needs b_hn (must stay inside r*(...)): nonzero on n lanes only
    b_h = jnp.zeros((3 * GP,), jnp.float32)
    b_h = b_h.at[2 * GP:2 * GP + H].set(b_hh[2 * H:3 * H])
    gru_pack = jnp.concatenate([wi_p, wh_p, b_i[None, :], b_h[None, :]], axis=0)

    return {
        "w_in": w_in,        # (364, 48)  laser|speed|bias input-stage pack
        "gru": gru_pack,     # (98, 384)  Wi^T | Wh^T | merged bias | b_hn
    }


if __name__ == "__main__":
    key = jax.random.PRNGKey(0)
    kp, kl, ks, kn, kl2, ks2, kn2 = jax.random.split(key, 7)

    params = init_params(kp)

    # ---- single-step forward (matches EncoderRNN.forward) ----
    laser = jax.random.uniform(kl, (B, LASER), jnp.float32)        # laser scan in [0,1]
    speed = jax.random.normal(ks, (B, 3), jnp.float32)             # (vx, vy, w)
    hidden0 = jnp.zeros((1, B, H), jnp.float32)                    # initHidden(B)
    noise = jax.random.normal(kn, (LASER,), jnp.float32) * 0.05    # DynamicGNoise sample

    fwd = jax.jit(encoder_forward)
    out, hid = fwd(params, laser, speed, hidden0, noise)
    jax.block_until_ready((out, hid))
    assert out.shape == (B, 1, H) and hid.shape == (1, B, H)
    assert out.dtype == jnp.float32 and hid.dtype == jnp.float32

    # ---- multi-step rollout (weights resident across the grid) ----
    T = 6
    laser_seq = jax.random.uniform(kl2, (T, B, LASER), jnp.float32)
    speed_seq = jax.random.normal(ks2, (T, B, 3), jnp.float32)
    noise_seq = jax.random.normal(kn2, (T, LASER), jnp.float32) * 0.05

    roll = jax.jit(encoder_rollout)
    outs, hid_T = roll(params, laser_seq, speed_seq, hidden0, noise_seq)
    jax.block_until_ready((outs, hid_T))
    assert outs.shape == (T, B, H) and hid_T.shape == (1, B, H)

    # cross-check: the gridded rollout == chaining T single-step calls
    h_ref = hidden0
    for t in range(T):
        o_t, h_ref = fwd(params, laser_seq[t], speed_seq[t], h_ref, noise_seq[t])
        assert jnp.allclose(o_t[:, 0, :], outs[t], atol=1e-4, rtol=1e-4)

    print("KERNEL_OK")
</pallas_src>

<mosaic_0001>
module attributes {stable_mosaic.version = 11 : i64} {
  func.func @_encoder_kernel(%arg0: memref<2x360xf32, #tpu.memory_space<vmem>>, %arg1: memref<1x360xf32, #tpu.memory_space<vmem>>, %arg2: memref<2x3xf32, #tpu.memory_space<vmem>>, %arg3: memref<2x48xf32, #tpu.memory_space<vmem>>, %arg4: memref<364x48xf32, #tpu.memory_space<vmem>>, %arg5: memref<98x384xf32, #tpu.memory_space<vmem>>, %arg6: memref<2x48xf32, #tpu.memory_space<vmem>>) attributes {dimension_semantics = [], scalar_prefetch = 0 : i64, scratch_operands = 0 : i64, tpu.core_type = #tpu.core_type<tc>} {
    %c0 = arith.constant 0 : index
    %c0_0 = arith.constant 0 : index
    %0 = vector.load %arg0[%c0, %c0_0] : memref<2x360xf32, #tpu.memory_space<vmem>>, vector<2x360xf32>
    %c0_1 = arith.constant 0 : index
    %c0_2 = arith.constant 0 : index
    %1 = vector.load %arg1[%c0_1, %c0_2] : memref<1x360xf32, #tpu.memory_space<vmem>>, vector<1x360xf32>
    %c0_3 = arith.constant 0 : index
    %c0_4 = arith.constant 0 : index
    %2 = vector.load %arg2[%c0_3, %c0_4] : memref<2x3xf32, #tpu.memory_space<vmem>>, vector<2x3xf32>
    %3 = vector.broadcast %1 : vector<1x360xf32> to vector<2x360xf32>
    %4 = arith.subf %0, %3 : vector<2x360xf32>
    %cst = arith.constant 0.000000e+00 : f32
    %cst_5 = arith.constant 1.000000e+00 : f32
    %5 = vector.broadcast %cst : f32 to vector<2x360xf32>
    %6 = arith.maximumf %5, %4 : vector<2x360xf32>
    %7 = vector.broadcast %cst_5 : f32 to vector<2x360xf32>
    %8 = arith.minimumf %7, %6 : vector<2x360xf32>
    %c0_6 = arith.constant 0 : index
    %c0_7 = arith.constant 0 : index
    %9 = vector.load %arg4[%c0_6, %c0_7] : memref<364x48xf32, #tpu.memory_space<vmem>>, vector<360x48xf32>
    %cst_8 = arith.constant dense<0.000000e+00> : vector<2x48xf32>
    %10 = tpu.matmul %8, %9, %cst_8 {dimension_numbers = #tpu.dot_dimension_numbers<[1], [0], [0], [1], [0, 0, 1, 1], [], []>} : vector<2x360xf32>, vector<360x48xf32>, vector<2x48xf32> -> vector<2x48xf32>
    %c360 = arith.constant 360 : index
    %c0_9 = arith.constant 0 : index
    %11 = vector.load %arg4[%c360, %c0_9] : memref<364x48xf32, #tpu.memory_space<vmem>>, vector<3x48xf32>
    %cst_10 = arith.constant dense<0.000000e+00> : vector<2x48xf32>
    %12 = tpu.matmul %2, %11, %cst_10 {dimension_numbers = #tpu.dot_dimension_numbers<[1], [0], [0], [1], [0, 0, 1, 1], [], []>} : vector<2x3xf32>, vector<3x48xf32>, vector<2x48xf32> -> vector<2x48xf32>
    %13 = arith.addf %10, %12 : vector<2x48xf32>
    %c363 = arith.constant 363 : index
    %c0_11 = arith.constant 0 : index
    %14 = vector.load %arg4[%c363, %c0_11] : memref<364x48xf32, #tpu.memory_space<vmem>>, vector<1x48xf32>
    %15 = vector.broadcast %14 : vector<1x48xf32> to vector<2x48xf32>
    %16 = arith.addf %13, %15 : vector<2x48xf32>
    %c0_12 = arith.constant 0 : index
    %c0_13 = arith.constant 0 : index
    %17 = vector.load %arg3[%c0_12, %c0_13] : memref<2x48xf32, #tpu.memory_space<vmem>>, vector<2x48xf32>
    %c0_14 = arith.constant 0 : index
    %c0_15 = arith.constant 0 : index
    %18 = vector.load %arg5[%c0_14, %c0_15] : memref<98x384xf32, #tpu.memory_space<vmem>>, vector<48x384xf32>
    %c48 = arith.constant 48 : index
    %c0_16 = arith.constant 0 : index
    %19 = vector.load %arg5[%c48, %c0_16] : memref<98x384xf32, #tpu.memory_space<vmem>>, vector<48x384xf32>
    %c96 = arith.constant 96 : index
    %c0_17 = arith.constant 0 : index
    %20 = vector.load %arg5[%c96, %c0_17] : memref<98x384xf32, #tpu.memory_space<vmem>>, vector<1x384xf32>
    %c97 = arith.constant 97 : index
    %c0_18 = arith.constant 0 : index
    %21 = vector.load %arg5[%c97, %c0_18] : memref<98x384xf32, #tpu.memory_space<vmem>>, vector<1x384xf32>
    %cst_19 = arith.constant dense<0.000000e+00> : vector<2x384xf32>
    %22 = tpu.matmul %16, %18, %cst_19 {dimension_numbers = #tpu.dot_dimension_numbers<[1], [0], [0], [1], [0, 0, 1, 1], [], []>} : vector<2x48xf32>, vector<48x384xf32>, vector<2x384xf32> -> vector<2x384xf32>
    %23 = vector.broadcast %20 : vector<1x384xf32> to vector<2x384xf32>
    %24 = arith.addf %22, %23 : vector<2x384xf32>
    %cst_20 = arith.constant dense<0.000000e+00> : vector<2x384xf32>
    %25 = tpu.matmul %17, %19, %cst_20 {dimension_numbers = #tpu.dot_dimension_numbers<[1], [0], [0], [1], [0, 0, 1, 1], [], []>} : vector<2x48xf32>, vector<48x384xf32>, vector<2x384xf32> -> vector<2x384xf32>
    %26 = vector.broadcast %21 : vector<1x384xf32> to vector<2x384xf32>
    %27 = arith.addf %25, %26 : vector<2x384xf32>
    %28 = vector.extract_strided_slice %24 {offsets = [0, 0], sizes = [2, 48], strides = [1, 1]} : vector<2x384xf32> to vector<2x48xf32>
    %29 = vector.extract_strided_slice %27 {offsets = [0, 0], sizes = [2, 48], strides = [1, 1]} : vector<2x384xf32> to vector<2x48xf32>
    %30 = arith.addf %28, %29 : vector<2x48xf32>
    %31 = arith.negf %30 : vector<2x48xf32>
    %32 = math.exp %31 : vector<2x48xf32>
    %cst_21 = arith.constant 1.000000e+00 : f32
    %33 = vector.broadcast %cst_21 : f32 to vector<2x48xf32>
    %34 = arith.addf %33, %32 : vector<2x48xf32>
    %35 = arith.divf %33, %34 : vector<2x48xf32>
    %36 = vector.extract_strided_slice %24 {offsets = [0, 128], sizes = [2, 48], strides = [1, 1]} : vector<2x384xf32> to vector<2x48xf32>
    %37 = vector.extract_strided_slice %27 {offsets = [0, 128], sizes = [2, 48], strides = [1, 1]} : vector<2x384xf32> to vector<2x48xf32>
    %38 = arith.addf %36, %37 : vector<2x48xf32>
    %39 = arith.negf %38 : vector<2x48xf32>
    %40 = math.exp %39 : vector<2x48xf32>
    %cst_22 = arith.constant 1.000000e+00 : f32
    %41 = vector.broadcast %cst_22 : f32 to vector<2x48xf32>
    %42 = arith.addf %41, %40 : vector<2x48xf32>
    %43 = arith.divf %41, %42 : vector<2x48xf32>
    %44 = vector.extract_strided_slice %24 {offsets = [0, 256], sizes = [2, 48], strides = [1, 1]} : vector<2x384xf32> to vector<2x48xf32>
    %45 = vector.extract_strided_slice %27 {offsets = [0, 256], sizes = [2, 48], strides = [1, 1]} : vector<2x384xf32> to vector<2x48xf32>
    %46 = arith.mulf %35, %45 : vector<2x48xf32>
    %47 = arith.addf %44, %46 : vector<2x48xf32>
    %48 = math.tanh %47 : vector<2x48xf32>
    %cst_23 = arith.constant 1.000000e+00 : f32
    %49 = vector.broadcast %cst_23 : f32 to vector<2x48xf32>
    %50 = arith.subf %49, %43 : vector<2x48xf32>
    %51 = arith.mulf %50, %48 : vector<2x48xf32>
    %52 = arith.mulf %43, %17 : vector<2x48xf32>
    %53 = arith.addf %51, %52 : vector<2x48xf32>
    %cst_24 = arith.constant dense<0.000000e+00> : vector<2x384xf32>
    %54 = tpu.matmul %53, %18, %cst_24 {dimension_numbers = #tpu.dot_dimension_numbers<[1], [0], [0], [1], [0, 0, 1, 1], [], []>} : vector<2x48xf32>, vector<48x384xf32>, vector<2x384xf32> -> vector<2x384xf32>
    %55 = vector.broadcast %20 : vector<1x384xf32> to vector<2x384xf32>
    %56 = arith.addf %54, %55 : vector<2x384xf32>
    %cst_25 = arith.constant dense<0.000000e+00> : vector<2x384xf32>
    %57 = tpu.matmul %53, %19, %cst_25 {dimension_numbers = #tpu.dot_dimension_numbers<[1], [0], [0], [1], [0, 0, 1, 1], [], []>} : vector<2x48xf32>, vector<48x384xf32>, vector<2x384xf32> -> vector<2x384xf32>
    %58 = vector.broadcast %21 : vector<1x384xf32> to vector<2x384xf32>
    %59 = arith.addf %57, %58 : vector<2x384xf32>
    %60 = vector.extract_strided_slice %56 {offsets = [0, 0], sizes = [2, 48], strides = [1, 1]} : vector<2x384xf32> to vector<2x48xf32>
    %61 = vector.extract_strided_slice %59 {offsets = [0, 0], sizes = [2, 48], strides = [1, 1]} : vector<2x384xf32> to vector<2x48xf32>
    %62 = arith.addf %60, %61 : vector<2x48xf32>
    %63 = arith.negf %62 : vector<2x48xf32>
    %64 = math.exp %63 : vector<2x48xf32>
    %cst_26 = arith.constant 1.000000e+00 : f32
    %65 = vector.broadcast %cst_26 : f32 to vector<2x48xf32>
    %66 = arith.addf %65, %64 : vector<2x48xf32>
    %67 = arith.divf %65, %66 : vector<2x48xf32>
    %68 = vector.extract_strided_slice %56 {offsets = [0, 128], sizes = [2, 48], strides = [1, 1]} : vector<2x384xf32> to vector<2x48xf32>
    %69 = vector.extract_strided_slice %59 {offsets = [0, 128], sizes = [2, 48], strides = [1, 1]} : vector<2x384xf32> to vector<2x48xf32>
    %70 = arith.addf %68, %69 : vector<2x48xf32>
    %71 = arith.negf %70 : vector<2x48xf32>
    %72 = math.exp %71 : vector<2x48xf32>
    %cst_27 = arith.constant 1.000000e+00 : f32
    %73 = vector.broadcast %cst_27 : f32 to vector<2x48xf32>
    %74 = arith.addf %73, %72 : vector<2x48xf32>
    %75 = arith.divf %73, %74 : vector<2x48xf32>
    %76 = vector.extract_strided_slice %56 {offsets = [0, 256], sizes = [2, 48], strides = [1, 1]} : vector<2x384xf32> to vector<2x48xf32>
    %77 = vector.extract_strided_slice %59 {offsets = [0, 256], sizes = [2, 48], strides = [1, 1]} : vector<2x384xf32> to vector<2x48xf32>
    %78 = arith.mulf %67, %77 : vector<2x48xf32>
    %79 = arith.addf %76, %78 : vector<2x48xf32>
    %80 = math.tanh %79 : vector<2x48xf32>
    %cst_28 = arith.constant 1.000000e+00 : f32
    %81 = vector.broadcast %cst_28 : f32 to vector<2x48xf32>
    %82 = arith.subf %81, %75 : vector<2x48xf32>
    %83 = arith.mulf %82, %80 : vector<2x48xf32>
    %84 = arith.mulf %75, %53 : vector<2x48xf32>
    %85 = arith.addf %83, %84 : vector<2x48xf32>
    %c0_29 = arith.constant 0 : index
    %c0_30 = arith.constant 0 : index
    %86 = vector.load %arg6[%c0_29, %c0_30] : memref<2x48xf32, #tpu.memory_space<vmem>>, vector<2x48xf32>
    tpu.vector_store %arg6[%c0_29, %c0_30], %85 {strides = array<i32>} : memref<2x48xf32, #tpu.memory_space<vmem>>, vector<2x48xf32>,
    return
  }
}

</mosaic_0001>

<llo_original>
// kernel: encoder_forward.1
$region0: #{encoder_forward.1}
  #allocation0 [shape = 'u32[]', space=smem, size = 0x4, offset = 0x4, fixed_abs, tag = 'smem constant byte address 0x4 - core index']
  #allocation1 [shape = 'u32[72,128]{1,0:T(1,128)}', space=vmem, size = 0x9000, scoped, tag = 'internal scratch']
  %s0 = inlined_call_operand.vmem [shape: f32[2,360], index: 0, kind: input, shape index: {}]
  %s1 = inlined_call_operand.vmem [shape: f32[1,360], index: 1, kind: input, shape index: {}]
  %s2 = inlined_call_operand.vmem [shape: f32[2,3], index: 2, kind: input, shape index: {}]
  %s3 = inlined_call_operand.vmem [shape: f32[2,48], index: 3, kind: input, shape index: {}]
  %s4 = inlined_call_operand.vmem [shape: f32[364,48], index: 4, kind: input, shape index: {}]
  %s5 = inlined_call_operand.vmem [shape: f32[98,384], index: 5, kind: input, shape index: {}]
  %s6 = inlined_call_operand.vmem [shape: f32[2,48], index: 6, kind: output, shape index: {}]
  %s7 = sld [smem:[#allocation0]]
  $region34: #{encoder_forward.1} parent=0
    _
  %s9 = ssub.s32 1, %s7
  %s10 = scalar_select 0, %s9, %s7
  // Predicated region
  $region2: #{encoder_forward.1} parent=0 // pred_check
    _
  $region3: #{encoder_forward.1} parent=0 // pred_check_branch
    %12 = sbr.rel (0) target = $region5
  $region4: #{encoder_forward.1} parent=0 // pred_region
    _
  $region5: #{encoder_forward.1} parent=0 // pred_fallthru
    _
  // Predicated region
  $region6: #{encoder_forward.1} parent=0 // pred_check
    _
  $region7: #{encoder_forward.1} parent=0 // pred_check_branch
    %14 = sbr.rel (0) target = $region9
  $region8: #{encoder_forward.1} parent=0 // pred_region
    _
  $region9: #{encoder_forward.1} parent=0 // pred_fallthru
    _
  // Predicated region
  $region10: #{encoder_forward.1} parent=0 // pred_check
    _
  $region11: #{encoder_forward.1} parent=0 // pred_check_branch
    %16 = sbr.rel (0) target = $region13
  $region12: #{encoder_forward.1} parent=0 // pred_region
    _
  $region13: #{encoder_forward.1} parent=0 // pred_fallthru
    _
  // Predicated region
  $region14: #{encoder_forward.1} parent=0 // pred_check
    _
  $region15: #{encoder_forward.1} parent=0 // pred_check_branch
    %18 = sbr.rel (0) target = $region17
  $region16: #{encoder_forward.1} parent=0 // pred_region
    _
  $region17: #{encoder_forward.1} parent=0 // pred_fallthru
    _
  // Predicated region
  $region18: #{encoder_forward.1} parent=0 // pred_check
    _
  $region19: #{encoder_forward.1} parent=0 // pred_check_branch
    %20 = sbr.rel (0) target = $region21
  $region20: #{encoder_forward.1} parent=0 // pred_region
    _
  $region21: #{encoder_forward.1} parent=0 // pred_fallthru
    _
  // Predicated region
  $region22: #{encoder_forward.1} parent=0 // pred_check
    _
  $region23: #{encoder_forward.1} parent=0 // pred_check_branch
    %22 = sbr.rel (0) target = $region25
  $region24: #{encoder_forward.1} parent=0 // pred_region
    _
  $region25: #{encoder_forward.1} parent=0 // pred_fallthru
    _
  %v23 = vld [vmem:[%s0] sm:$0x3f]
  %v24 = vld [vmem:[%s1] sm:$0x7]
  %v25 = vld [vmem:[%s2] sm:$0x3]
  %v27 = vperm.slane %v24, 0
  %v28 = vperm.slane %v24, 1
  %v29 = vperm.slane %v24, 2
  %v30 = vrot.slane %v28, 6
  %v31 = vrot.slane %v29, 4
  %vm32 = vcmask 1041408
  %v33 = vsel %vm32, %v27, %v30
  %vm34 = vcmask 1043456
  %v35 = vsel %vm34, %v33, %v31
  %v37 = vsub.f32 %v23, %v35
  %v38 = vmax.f32 %v37, 0.0
  %v39 = vmin.f32 %v38, 1.0
  %v40 = vld [vmem:[%s4] sm:$0xff]
  %v41 = vld [vmem:[%s4 + $0x8] sm:$0xff]
  %v42 = vld [vmem:[%s4 + $0x10] sm:$0xff]
  %v43 = vld [vmem:[%s4 + $0x18] sm:$0xff]
  %v44 = vld [vmem:[%s4 + $0x20] sm:$0xff]
  %v45 = vld [vmem:[%s4 + $0x28] sm:$0xff]
  %v46 = vld [vmem:[%s4 + $0x30] sm:$0xff]
  %v47 = vld [vmem:[%s4 + $0x38] sm:$0xff]
  %v48 = vld [vmem:[%s4 + $0x40] sm:$0xff]
  %v49 = vld [vmem:[%s4 + $0x48] sm:$0xff]
  %v50 = vld [vmem:[%s4 + $0x50] sm:$0xff]
  %v51 = vld [vmem:[%s4 + $0x58] sm:$0xff]
  %v52 = vld [vmem:[%s4 + $0x60] sm:$0xff]
  %v53 = vld [vmem:[%s4 + $0x68] sm:$0xff]
  %v54 = vld [vmem:[%s4 + $0x70] sm:$0xff]
  %v55 = vld [vmem:[%s4 + $0x78] sm:$0xff]
  %v56 = vld [vmem:[%s4 + $0x80] sm:$0xff]
  %v57 = vld [vmem:[%s4 + $0x88] sm:$0xff]
  %v58 = vld [vmem:[%s4 + $0x90] sm:$0xff]
  %v59 = vld [vmem:[%s4 + $0x98] sm:$0xff]
  %v60 = vld [vmem:[%s4 + $0xa0] sm:$0xff]
  %v61 = vld [vmem:[%s4 + $0xa8] sm:$0xff]
  %v62 = vld [vmem:[%s4 + $0xb0] sm:$0xff]
  %v63 = vld [vmem:[%s4 + $0xb8] sm:$0xff]
  %v64 = vld [vmem:[%s4 + $0xc0] sm:$0xff]
  %v65 = vld [vmem:[%s4 + $0xc8] sm:$0xff]
  %v66 = vld [vmem:[%s4 + $0xd0] sm:$0xff]
  %v67 = vld [vmem:[%s4 + $0xd8] sm:$0xff]
  %v68 = vld [vmem:[%s4 + $0xe0] sm:$0xff]
  %v69 = vld [vmem:[%s4 + $0xe8] sm:$0xff]
  %v70 = vld [vmem:[%s4 + $0xf0] sm:$0xff]
  %v71 = vld [vmem:[%s4 + $0xf8] sm:$0xff]
  %v72 = vld [vmem:[%s4 + $0x100] sm:$0xff]
  %v73 = vld [vmem:[%s4 + $0x108] sm:$0xff]
  %v74 = vld [vmem:[%s4 + $0x110] sm:$0xff]
  %v75 = vld [vmem:[%s4 + $0x118] sm:$0xff]
  %v76 = vld [vmem:[%s4 + $0x120] sm:$0xff]
  %v77 = vld [vmem:[%s4 + $0x128] sm:$0xff]
  %v78 = vld [vmem:[%s4 + $0x130] sm:$0xff]
  %v79 = vld [vmem:[%s4 + $0x138] sm:$0xff]
  %v80 = vld [vmem:[%s4 + $0x140] sm:$0xff]
  %v81 = vld [vmem:[%s4 + $0x148] sm:$0xff]
  %v82 = vld [vmem:[%s4 + $0x150] sm:$0xff]
  %v83 = vld [vmem:[%s4 + $0x158] sm:$0xff]
  %v84 = vld [vmem:[%s4 + $0x160] sm:$0xff]
  %v85 = vld [vmem:[%s4 + $0x168] sm:$0x7]
  %vm86 = vcmask 23552
  %v88 = vsel %vm86, %v25, 0
  %vm90 = vcmask 1042432
  %v92 = vsel %vm90, %v85, 0
  %94 = vmatpush.msra.mxu0 0.0
  %95 = vmatpush.msra.mxu0 0.0
  %96 = vmatpush.msra.mxu0 0.0
  %97 = vmatpush.msra.mxu0 0.0
  %98 = vmatpush.msra.mxu0 0.0
  %99 = vmatpush.msra.mxu0 0.0
  %100 = vmatpush.msra.mxu0 0.0
  %101 = vmatpush.msra.mxu0 0.0
  %102 = vmatpush.msra.mxu0 0.0
  %103 = vmatpush.msra.mxu0 0.0
  %104 = vmatpush.msra.mxu0 0.0
  %105 = vmatpush.msra.mxu0 0.0
  %106 = vmatpush.msra.mxu0 0.0
  %107 = vmatpush.msra.mxu0 0.0
  %108 = vmatpush.msra.mxu0 0.0
  %109 = vmatpush.msra.mxu0 %v92
  %110 = vmatmul.f32.gmra.mxu0 %v88
  %v111 = vpop.f32.mrf.mxu0
  %v112 = vadd.f32 0.0, %v111
  %113 = vdwg.mxu0
  %115 = vst [vmem:[#allocation1] ss:$4 sm:$0xff] %v39
  %v116 = vld.sshfl [vmem:[#allocation1] sm:$0xff pattern:$0x73625140]
  %v117 = vld.sshfl [vmem:[#allocation1 + $0x8] sm:$0xff pattern:$0x73625140]
  %v118 = vld.sshfl [vmem:[#allocation1 + $0x10] sm:$0xff pattern:$0x73625140]
  %vm121 = vcmask 850944
  %v122 = vsel %vm121, %v118, 0
  %124 = vmatpush.msra.mxu0 %v55
  %125 = vmatpush.msra.mxu0 %v54
  %126 = vmatpush.msra.mxu0 %v53
  %127 = vmatpush.msra.mxu0 %v52
  %128 = vmatpush.msra.mxu0 %v51
  %129 = vmatpush.msra.mxu0 %v50
  %130 = vmatpush.msra.mxu0 %v49
  %131 = vmatpush.msra.mxu0 %v48
  %132 = vmatpush.msra.mxu0 %v47
  %133 = vmatpush.msra.mxu0 %v46
  %134 = vmatpush.msra.mxu0 %v45
  %135 = vmatpush.msra.mxu0 %v44
  %136 = vmatpush.msra.mxu0 %v43
  %137 = vmatpush.msra.mxu0 %v42
  %138 = vmatpush.msra.mxu0 %v41
  %139 = vmatpush.msra.mxu0 %v40
  %140 = vmatmul.f32.gmra.mxu0 %v116
  %v141 = vpop.f32.mrf.mxu0
  %v142 = vadd.f32 %v112, %v141
  %143 = vdwg.mxu0
  %144 = vmatpush.msra.mxu0 %v71
  %145 = vmatpush.msra.mxu0 %v70
  %146 = vmatpush.msra.mxu0 %v69
  %147 = vmatpush.msra.mxu0 %v68
  %148 = vmatpush.msra.mxu0 %v67
  %149 = vmatpush.msra.mxu0 %v66
  %150 = vmatpush.msra.mxu0 %v65
  %151 = vmatpush.msra.mxu0 %v64
  %152 = vmatpush.msra.mxu0 %v63
  %153 = vmatpush.msra.mxu0 %v62
  %154 = vmatpush.msra.mxu0 %v61
  %155 = vmatpush.msra.mxu0 %v60
  %156 = vmatpush.msra.mxu0 %v59
  %157 = vmatpush.msra.mxu0 %v58
  %158 = vmatpush.msra.mxu0 %v57
  %159 = vmatpush.msra.mxu0 %v56
  %160 = vmatmul.f32.gmra.mxu0 %v117
  %v161 = vpop.f32.mrf.mxu0
  %v162 = vadd.f32 %v142, %v161
  %163 = vdwg.mxu0
  %164 = vmatpush.msra.mxu0 0.0
  %165 = vmatpush.msra.mxu0 0.0
  %166 = vmatpush.msra.mxu0 0.0
  %167 = vmatpush.msra.mxu0 %v84
  %168 = vmatpush.msra.mxu0 %v83
  %169 = vmatpush.msra.mxu0 %v82
  %170 = vmatpush.msra.mxu0 %v81
  %171 = vmatpush.msra.mxu0 %v80
  %172 = vmatpush.msra.mxu0 %v79
  %173 = vmatpush.msra.mxu0 %v78
  %174 = vmatpush.msra.mxu0 %v77
  %175 = vmatpush.msra.mxu0 %v76
  %176 = vmatpush.msra.mxu0 %v75
  %177 = vmatpush.msra.mxu0 %v74
  %178 = vmatpush.msra.mxu0 %v73
  %179 = vmatpush.msra.mxu0 %v72
  %180 = vmatmul.f32.gmra.mxu0 %v122
  %v181 = vpop.f32.mrf.mxu0
  %v182 = vadd.f32 %v162, %v181
  %183 = vdwg.mxu0
  %v184 = vld [vmem:[%s4 + $0x16b] sm:$0x1]
  %v185 = vperm.slane %v184, 0
  %v186 = vadd.f32 %v182, %v185
  %v187 = vld [vmem:[%s3] sm:$0x3]
  %v188 = vld [vmem:[%s5] sm:$0xff]
  %v189 = vld [vmem:[%s5 + $0x8] sm:$0xff]
  %v190 = vld [vmem:[%s5 + $0x10] sm:$0xff]
  %v191 = vld [vmem:[%s5 + $0x18] sm:$0xff]
  %v192 = vld [vmem:[%s5 + $0x20] sm:$0xff]
  %v193 = vld [vmem:[%s5 + $0x28] sm:$0xff]
  %v194 = vld [vmem:[%s5 + $0x30] sm:$0xff]
  %v195 = vld [vmem:[%s5 + $0x38] sm:$0xff]
  %v196 = vld [vmem:[%s5 + $0x40] sm:$0xff]
  %v197 = vld [vmem:[%s5 + $0x48] sm:$0xff]
  %v198 = vld [vmem:[%s5 + $0x50] sm:$0xff]
  %v199 = vld [vmem:[%s5 + $0x58] sm:$0xff]
  %v200 = vld [vmem:[%s5 + $0x60] sm:$0xff]
  %v201 = vld [vmem:[%s5 + $0x68] sm:$0xff]
  %v202 = vld [vmem:[%s5 + $0x70] sm:$0xff]
  %v203 = vld [vmem:[%s5 + $0x78] sm:$0xff]
  %v204 = vld [vmem:[%s5 + $0x80] sm:$0xff]
  %v205 = vld [vmem:[%s5 + $0x88] sm:$0xff]
  %v206 = vld [vmem:[%s5 + $0x90] sm:$0xff]
  %v207 = vld [vmem:[%s5 + $0x98] sm:$0xff]
  %v208 = vld [vmem:[%s5 + $0xa0] sm:$0xff]
  %v209 = vld [vmem:[%s5 + $0xa8] sm:$0xff]
  %v210 = vld [vmem:[%s5 + $0xb0] sm:$0xff]
  %v211 = vld [vmem:[%s5 + $0xb8] sm:$0xff]
  %v212 = vld [vmem:[%s5 + $0xc0] sm:$0xff]
  %v213 = vld [vmem:[%s5 + $0xc8] sm:$0xff]
  %v214 = vld [vmem:[%s5 + $0xd0] sm:$0xff]
  %v215 = vld [vmem:[%s5 + $0xd8] sm:$0xff]
  %v216 = vld [vmem:[%s5 + $0xe0] sm:$0xff]
  %v217 = vld [vmem:[%s5 + $0xe8] sm:$0xff]
  %v218 = vld [vmem:[%s5 + $0xf0] sm:$0xff]
  %v219 = vld [vmem:[%s5 + $0xf8] sm:$0xff]
  %v220 = vld [vmem:[%s5 + $0x100] sm:$0xff]
  %v221 = vld [vmem:[%s5 + $0x108] sm:$0xff]
  %v222 = vld [vmem:[%s5 + $0x110] sm:$0xff]
  %v223 = vld [vmem:[%s5 + $0x118] sm:$0xff]
  %s224 = scalar_lea.vmem %s5, 288
  %v225 = vld [vmem:[%s224] ss:$8 sm:$0x7]
  %s226 = scalar_lea.vmem %s5, 289
  %v227 = vld [vmem:[%s226] ss:$8 sm:$0x7]
  %v229 = vperm.slane %v225, 0
  %v230 = vperm.slane %v225, 1
  %v231 = vperm.slane %v225, 2
  %vm235 = vcmask 392192
  %v237 = vsel %vm235, %v186, 0
  %239 = vmatpush.msra.mxu0 0.0
  %240 = vmatpush.msra.mxu0 0.0
  %241 = vmatpush.msra.mxu0 0.0
  %242 = vmatpush.msra.mxu0 0.0
  %243 = vmatpush.msra.mxu0 0.0
  %244 = vmatpush.msra.mxu0 0.0
  %245 = vmatpush.msra.mxu0 0.0
  %246 = vmatpush.msra.mxu0 0.0
  %247 = vmatpush.msra.mxu0 0.0
  %248 = vmatpush.msra.mxu0 0.0
  %249 = vmatpush.msra.mxu0 %v203
  %250 = vmatpush.msra.mxu0 %v200
  %251 = vmatpush.msra.mxu0 %v197
  %252 = vmatpush.msra.mxu0 %v194
  %253 = vmatpush.msra.mxu0 %v191
  %254 = vmatpush.msra.mxu0 %v188
  %255 = vmatmul.f32.gmra.mxu0 %v237
  %v256 = vpop.f32.mrf.mxu0
  %v257 = vadd.f32 %v229, %v256
  %258 = vdwg.mxu0
  %259 = vmatpush.msra.mxu0 0.0
  %260 = vmatpush.msra.mxu0 0.0
  %261 = vmatpush.msra.mxu0 0.0
  %262 = vmatpush.msra.mxu0 0.0
  %263 = vmatpush.msra.mxu0 0.0
  %264 = vmatpush.msra.mxu0 0.0
  %265 = vmatpush.msra.mxu0 0.0
  %266 = vmatpush.msra.mxu0 0.0
  %267 = vmatpush.msra.mxu0 0.0
  %268 = vmatpush.msra.mxu0 0.0
  %269 = vmatpush.msra.mxu0 %v204
  %270 = vmatpush.msra.mxu0 %v201
  %271 = vmatpush.msra.mxu0 %v198
  %272 = vmatpush.msra.mxu0 %v195
  %273 = vmatpush.msra.mxu0 %v192
  %274 = vmatpush.msra.mxu0 %v189
  %275 = vmatmul.f32.gmra.mxu0 %v237
  %v276 = vpop.f32.mrf.mxu0
  %v277 = vadd.f32 %v230, %v276
  %278 = vdwg.mxu0
  %279 = vmatpush.msra.mxu0 0.0
  %280 = vmatpush.msra.mxu0 0.0
  %281 = vmatpush.msra.mxu0 0.0
  %282 = vmatpush.msra.mxu0 0.0
  %283 = vmatpush.msra.mxu0 0.0
  %284 = vmatpush.msra.mxu0 0.0
  %285 = vmatpush.msra.mxu0 0.0
  %286 = vmatpush.msra.mxu0 0.0
  %287 = vmatpush.msra.mxu0 0.0
  %288 = vmatpush.msra.mxu0 0.0
  %289 = vmatpush.msra.mxu0 %v205
  %290 = vmatpush.msra.mxu0 %v202
  %291 = vmatpush.msra.mxu0 %v199
  %292 = vmatpush.msra.mxu0 %v196
  %293 = vmatpush.msra.mxu0 %v193
  %294 = vmatpush.msra.mxu0 %v190
  %295 = vmatmul.f32.gmra.mxu0 %v237
  %v296 = vpop.f32.mrf.mxu0
  %v297 = vadd.f32 %v231, %v296
  %298 = vdwg.mxu0
  %v300 = vperm.slane %v227, 0
  %v301 = vperm.slane %v227, 1
  %v302 = vperm.slane %v227, 2
  %v307 = vsel %vm235, %v187, 0
  %309 = vmatpush.msra.mxu0 0.0
  %310 = vmatpush.msra.mxu0 0.0
  %311 = vmatpush.msra.mxu0 0.0
  %312 = vmatpush.msra.mxu0 0.0
  %313 = vmatpush.msra.mxu0 0.0
  %314 = vmatpush.msra.mxu0 0.0
  %315 = vmatpush.msra.mxu0 0.0
  %316 = vmatpush.msra.mxu0 0.0
  %317 = vmatpush.msra.mxu0 0.0
  %318 = vmatpush.msra.mxu0 0.0
  %319 = vmatpush.msra.mxu0 %v221
  %320 = vmatpush.msra.mxu0 %v218
  %321 = vmatpush.msra.mxu0 %v215
  %322 = vmatpush.msra.mxu0 %v212
  %323 = vmatpush.msra.mxu0 %v209
  %324 = vmatpush.msra.mxu0 %v206
  %325 = vmatmul.f32.gmra.mxu0 %v307
  %v326 = vpop.f32.mrf.mxu0
  %v327 = vadd.f32 %v300, %v326
  %328 = vdwg.mxu0
  %329 = vmatpush.msra.mxu0 0.0
  %330 = vmatpush.msra.mxu0 0.0
  %331 = vmatpush.msra.mxu0 0.0
  %332 = vmatpush.msra.mxu0 0.0
  %333 = vmatpush.msra.mxu0 0.0
  %334 = vmatpush.msra.mxu0 0.0
  %335 = vmatpush.msra.mxu0 0.0
  %336 = vmatpush.msra.mxu0 0.0
  %337 = vmatpush.msra.mxu0 0.0
  %338 = vmatpush.msra.mxu0 0.0
  %339 = vmatpush.msra.mxu0 %v222
  %340 = vmatpush.msra.mxu0 %v219
  %341 = vmatpush.msra.mxu0 %v216
  %342 = vmatpush.msra.mxu0 %v213
  %343 = vmatpush.msra.mxu0 %v210
  %344 = vmatpush.msra.mxu0 %v207
  %345 = vmatmul.f32.gmra.mxu0 %v307
  %v346 = vpop.f32.mrf.mxu0
  %v347 = vadd.f32 %v301, %v346
  %348 = vdwg.mxu0
  %349 = vmatpush.msra.mxu0 0.0
  %350 = vmatpush.msra.mxu0 0.0
  %351 = vmatpush.msra.mxu0 0.0
  %352 = vmatpush.msra.mxu0 0.0
  %353 = vmatpush.msra.mxu0 0.0
  %354 = vmatpush.msra.mxu0 0.0
  %355 = vmatpush.msra.mxu0 0.0
  %356 = vmatpush.msra.mxu0 0.0
  %357 = vmatpush.msra.mxu0 0.0
  %358 = vmatpush.msra.mxu0 0.0
  %359 = vmatpush.msra.mxu0 %v223
  %360 = vmatpush.msra.mxu0 %v220
  %361 = vmatpush.msra.mxu0 %v217
  %362 = vmatpush.msra.mxu0 %v214
  %363 = vmatpush.msra.mxu0 %v211
  %364 = vmatpush.msra.mxu0 %v208
  %365 = vmatmul.f32.gmra.mxu0 %v307
  %v366 = vpop.f32.mrf.mxu0
  %v367 = vadd.f32 %v302, %v366
  %368 = vdwg.mxu0
  %v369 = vadd.f32 %v257, %v327
  %v370 = vxor.u32 %v369, 2147483648
  %v371 = vmul.f32 %v370, 1.442695
  %v372 = vpow.pop %v371
  %v373 = vadd.f32 %v372, 1.0
  %v374 = vrcp.pop %v373
  %v375 = vmul.f32 %v373, %v374
  %v376 = vsub.f32 1.0, %v375
  %v377 = vmul.f32 %v374, %v376
  %v378 = vadd.f32 %v374, %v377
  %vm379 = vweird.f32 %v373
  %vm380 = vweird.f32 %v374
  %vm381 = vmor %vm379, %vm380
  %v382 = vsel %vm381, %v374, %v378
  %v383 = vand.u32 2147483647, %v373
  %vm384 = vcmp.eq.f32.partialorder %v383, 8.507059e+37
  %v385 = vand.u32 %v373, 2147483648
  %v386 = vor.u32 1.1754944e-38, %v385
  %v387 = vsel %vm384, %v386, %v382
  %v388 = vmul.f32 1.0, %v387
  %v389 = vadd.f32 %v277, %v347
  %v390 = vxor.u32 %v389, 2147483648
  %v391 = vmul.f32 %v390, 1.442695
  %v392 = vpow.pop %v391
  %v393 = vadd.f32 %v392, 1.0
  %v394 = vrcp.pop %v393
  %v395 = vmul.f32 %v393, %v394
  %v396 = vsub.f32 1.0, %v395
  %v397 = vmul.f32 %v394, %v396
  %v398 = vadd.f32 %v394, %v397
  %vm399 = vweird.f32 %v393
  %vm400 = vweird.f32 %v394
  %vm401 = vmor %vm399, %vm400
  %v402 = vsel %vm401, %v394, %v398
  %v403 = vand.u32 2147483647, %v393
  %vm404 = vcmp.eq.f32.partialorder %v403, 8.507059e+37
  %v405 = vand.u32 %v393, 2147483648
  %v406 = vor.u32 1.1754944e-38, %v405
  %v407 = vsel %vm404, %v406, %v402
  %v408 = vmul.f32 1.0, %v407
  %v409 = vmul.f32 %v388, %v367
  %v410 = vadd.f32 %v297, %v409
  %v411 = vtanh.pop %v410
  %v412 = vsub.f32 1.0, %v408
  %v413 = vmul.f32 %v412, %v411
  %v414 = vmul.f32 %v408, %v187
  %v415 = vadd.f32 %v413, %v414
  %v417 = vsel %vm235, %v415, 0
  %419 = vmatpush.msra.mxu0 0.0
  %420 = vmatpush.msra.mxu0 0.0
  %421 = vmatpush.msra.mxu0 0.0
  %422 = vmatpush.msra.mxu0 0.0
  %423 = vmatpush.msra.mxu0 0.0
  %424 = vmatpush.msra.mxu0 0.0
  %425 = vmatpush.msra.mxu0 0.0
  %426 = vmatpush.msra.mxu0 0.0
  %427 = vmatpush.msra.mxu0 0.0
  %428 = vmatpush.msra.mxu0 0.0
  %429 = vmatpush.msra.mxu0 %v203
  %430 = vmatpush.msra.mxu0 %v200
  %431 = vmatpush.msra.mxu0 %v197
  %432 = vmatpush.msra.mxu0 %v194
  %433 = vmatpush.msra.mxu0 %v191
  %434 = vmatpush.msra.mxu0 %v188
  %435 = vmatmul.f32.gmra.mxu0 %v417
  %v436 = vpop.f32.mrf.mxu0
  %v437 = vadd.f32 %v229, %v436
  %438 = vdwg.mxu0
  %439 = vmatpush.msra.mxu0 0.0
  %440 = vmatpush.msra.mxu0 0.0
  %441 = vmatpush.msra.mxu0 0.0
  %442 = vmatpush.msra.mxu0 0.0
  %443 = vmatpush.msra.mxu0 0.0
  %444 = vmatpush.msra.mxu0 0.0
  %445 = vmatpush.msra.mxu0 0.0
  %446 = vmatpush.msra.mxu0 0.0
  %447 = vmatpush.msra.mxu0 0.0
  %448 = vmatpush.msra.mxu0 0.0
  %449 = vmatpush.msra.mxu0 %v204
  %450 = vmatpush.msra.mxu0 %v201
  %451 = vmatpush.msra.mxu0 %v198
  %452 = vmatpush.msra.mxu0 %v195
  %453 = vmatpush.msra.mxu0 %v192
  %454 = vmatpush.msra.mxu0 %v189
  %455 = vmatmul.f32.gmra.mxu0 %v417
  %v456 = vpop.f32.mrf.mxu0
  %v457 = vadd.f32 %v230, %v456
  %458 = vdwg.mxu0
  %459 = vmatpush.msra.mxu0 0.0
  %460 = vmatpush.msra.mxu0 0.0
  %461 = vmatpush.msra.mxu0 0.0
  %462 = vmatpush.msra.mxu0 0.0
  %463 = vmatpush.msra.mxu0 0.0
  %464 = vmatpush.msra.mxu0 0.0
  %465 = vmatpush.msra.mxu0 0.0
  %466 = vmatpush.msra.mxu0 0.0
  %467 = vmatpush.msra.mxu0 0.0
  %468 = vmatpush.msra.mxu0 0.0
  %469 = vmatpush.msra.mxu0 %v205
  %470 = vmatpush.msra.mxu0 %v202
  %471 = vmatpush.msra.mxu0 %v199
  %472 = vmatpush.msra.mxu0 %v196
  %473 = vmatpush.msra.mxu0 %v193
  %474 = vmatpush.msra.mxu0 %v190
  %475 = vmatmul.f32.gmra.mxu0 %v417
  %v476 = vpop.f32.mrf.mxu0
  %v477 = vadd.f32 %v231, %v476
  %478 = vdwg.mxu0
  %479 = vmatpush.msra.mxu0 0.0
  %480 = vmatpush.msra.mxu0 0.0
  %481 = vmatpush.msra.mxu0 0.0
  %482 = vmatpush.msra.mxu0 0.0
  %483 = vmatpush.msra.mxu0 0.0
  %484 = vmatpush.msra.mxu0 0.0
  %485 = vmatpush.msra.mxu0 0.0
  %486 = vmatpush.msra.mxu0 0.0
  %487 = vmatpush.msra.mxu0 0.0
  %488 = vmatpush.msra.mxu0 0.0
  %489 = vmatpush.msra.mxu0 %v221
  %490 = vmatpush.msra.mxu0 %v218
  %491 = vmatpush.msra.mxu0 %v215
  %492 = vmatpush.msra.mxu0 %v212
  %493 = vmatpush.msra.mxu0 %v209
  %494 = vmatpush.msra.mxu0 %v206
  %495 = vmatmul.f32.gmra.mxu0 %v417
  %v496 = vpop.f32.mrf.mxu0
  %v497 = vadd.f32 %v300, %v496
  %498 = vdwg.mxu0
  %499 = vmatpush.msra.mxu0 0.0
  %500 = vmatpush.msra.mxu0 0.0
  %501 = vmatpush.msra.mxu0 0.0
  %502 = vmatpush.msra.mxu0 0.0
  %503 = vmatpush.msra.mxu0 0.0
  %504 = vmatpush.msra.mxu0 0.0
  %505 = vmatpush.msra.mxu0 0.0
  %506 = vmatpush.msra.mxu0 0.0
  %507 = vmatpush.msra.mxu0 0.0
  %508 = vmatpush.msra.mxu0 0.0
  %509 = vmatpush.msra.mxu0 %v222
  %510 = vmatpush.msra.mxu0 %v219
  %511 = vmatpush.msra.mxu0 %v216
  %512 = vmatpush.msra.mxu0 %v213
  %513 = vmatpush.msra.mxu0 %v210
  %514 = vmatpush.msra.mxu0 %v207
  %515 = vmatmul.f32.gmra.mxu0 %v417
  %v516 = vpop.f32.mrf.mxu0
  %v517 = vadd.f32 %v301, %v516
  %518 = vdwg.mxu0
  %519 = vmatpush.msra.mxu0 0.0
  %520 = vmatpush.msra.mxu0 0.0
  %521 = vmatpush.msra.mxu0 0.0
  %522 = vmatpush.msra.mxu0 0.0
  %523 = vmatpush.msra.mxu0 0.0
  %524 = vmatpush.msra.mxu0 0.0
  %525 = vmatpush.msra.mxu0 0.0
  %526 = vmatpush.msra.mxu0 0.0
  %527 = vmatpush.msra.mxu0 0.0
  %528 = vmatpush.msra.mxu0 0.0
  %529 = vmatpush.msra.mxu0 %v223
  %530 = vmatpush.msra.mxu0 %v220
  %531 = vmatpush.msra.mxu0 %v217
  %532 = vmatpush.msra.mxu0 %v214
  %533 = vmatpush.msra.mxu0 %v211
  %534 = vmatpush.msra.mxu0 %v208
  %535 = vmatmul.f32.gmra.mxu0 %v417
  %v536 = vpop.f32.mrf.mxu0
  %v537 = vadd.f32 %v302, %v536
  %538 = vdwg.mxu0
  %v539 = vadd.f32 %v437, %v497
  %v540 = vxor.u32 %v539, 2147483648
  %v541 = vmul.f32 %v540, 1.442695
  %v542 = vpow.pop %v541
  %v543 = vadd.f32 %v542, 1.0
  %v544 = vrcp.pop %v543
  %v545 = vmul.f32 %v543, %v544
  %v546 = vsub.f32 1.0, %v545
  %v547 = vmul.f32 %v544, %v546
  %v548 = vadd.f32 %v544, %v547
  %vm549 = vweird.f32 %v543
  %vm550 = vweird.f32 %v544
  %vm551 = vmor %vm549, %vm550
  %v552 = vsel %vm551, %v544, %v548
  %v553 = vand.u32 2147483647, %v543
  %vm554 = vcmp.eq.f32.partialorder %v553, 8.507059e+37
  %v555 = vand.u32 %v543, 2147483648
  %v556 = vor.u32 1.1754944e-38, %v555
  %v557 = vsel %vm554, %v556, %v552
  %v558 = vmul.f32 1.0, %v557
  %v559 = vadd.f32 %v457, %v517
  %v560 = vxor.u32 %v559, 2147483648
  %v561 = vmul.f32 %v560, 1.442695
  %v562 = vpow.pop %v561
  %v563 = vadd.f32 %v562, 1.0
  %v564 = vrcp.pop %v563
  %v565 = vmul.f32 %v563, %v564
  %v566 = vsub.f32 1.0, %v565
  %v567 = vmul.f32 %v564, %v566
  %v568 = vadd.f32 %v564, %v567
  %vm569 = vweird.f32 %v563
  %vm570 = vweird.f32 %v564
  %vm571 = vmor %vm569, %vm570
  %v572 = vsel %vm571, %v564, %v568
  %v573 = vand.u32 2147483647, %v563
  %vm574 = vcmp.eq.f32.partialorder %v573, 8.507059e+37
  %v575 = vand.u32 %v563, 2147483648
  %v576 = vor.u32 1.1754944e-38, %v575
  %v577 = vsel %vm574, %v576, %v572
  %v578 = vmul.f32 1.0, %v577
  %v579 = vmul.f32 %v558, %v537
  %v580 = vadd.f32 %v477, %v579
  %v581 = vtanh.pop %v580
  %v582 = vsub.f32 1.0, %v578
  %v583 = vmul.f32 %v582, %v581
  %v584 = vmul.f32 %v578, %v415
  %v585 = vadd.f32 %v583, %v584
  %vm586 = vcmask 386048
  %587 = vst.msk [vmem:[%s6] sm:$0x3] %vm586, %v585
  // Predicated region
  $region26: #{encoder_forward.1} parent=0 // pred_check
    _
  $region27: #{encoder_forward.1} parent=0 // pred_check_branch
    %589 = sbr.rel (0) target = $region29
  $region28: #{encoder_forward.1} parent=0 // pred_region
    _
  $region29: #{encoder_forward.1} parent=0 // pred_fallthru
    _
  // Predicated region
  $region30: #{encoder_forward.1} parent=0 // pred_check
    _
  $region31: #{encoder_forward.1} parent=0 // pred_check_branch
    %591 = sbr.rel (0) target = $region33
  $region32: #{encoder_forward.1} parent=0 // pred_region
    _
  $region33: #{encoder_forward.1} parent=0 // pred_fallthru
    _

</llo_original>
